<compile_context>
chip_gen: v7x
topology: tpu7x:2x2x1
jax: 0.10.0
libtpu: 0.0.40
codegen_flags: <defaults>
</compile_context>

<pallas_src>
import math
import functools

import jax
import jax.numpy as jnp
from jax import lax
from jax.experimental import pallas as pl
from jax.experimental.pallas import tpu as pltpu

_NP = 9  # packed per-channel parameter columns


def _make_resblock_kernel(C, CH, BB, TT, HW, K, DIL, P, NT, mm_dtype,
                          approx_recip):
    """One grid step = BB batch rows x one (C, TT) time tile."""
    EPS = 1e-8

    def ln(z, gamma, beta, nfeat):
        # Per-column (per time-step) LayerNorm over channels.
        # torch.std is unbiased (ddof=1); eps is added to std (not var).
        mu = jnp.mean(z, axis=0, keepdims=True)
        d = z - mu
        var = jnp.sum(d * d, axis=0, keepdims=True) / (nfeat - 1)
        inv = pl.reciprocal(jnp.sqrt(var) + EPS, approx=approx_recip)
        return d * inv * gamma + beta

    def kernel(x_ref, p_ref, w1_ref, w2f_ref, w3_ref, o_ref, carry_ref):
        t = pl.program_id(1)

        # Packed per-channel parameters: one (C, 9) slab.
        p = p_ref[...]
        g1, b1 = p[:, 0:1], p[:, 1:2]
        c1b, g2, b2 = p[:CH, 2:3], p[:CH, 3:4], p[:CH, 4:5]
        c2b, g3, b3 = p[:CH, 5:6], p[:CH, 6:7], p[:CH, 7:8]
        c3b = p[:, 8:9]

        w1 = w1_ref[...]      # (CH, C)
        w2f = w2f_ref[...]    # (CH, K*CH)  fused dilated-conv taps
        w3 = w3_ref[...]      # (C, CH)

        # Zero the carried h2 tail at the first time tile of each batch block
        # (this reproduces ConstantPad1d((P, 0), 0.0) exactly).
        @pl.when(t == 0)
        def _():
            carry_ref[...] = jnp.zeros_like(carry_ref)

        for bb in range(BB):
            x = x_ref[bb].astype(jnp.float32)                 # (C, TT)

            # Stage 1 (pointwise in time): LN(C)->ReLU->Conv1x1->LN(CH)->ReLU
            h = jnp.maximum(ln(x, g1, b1, C), 0.0)
            h = jnp.dot(w1, h.astype(mm_dtype),
                        preferred_element_type=jnp.float32) + c1b
            h2 = jnp.maximum(ln(h, g2, b2, CH), 0.0)          # (CH, TT)

            if P > 0:
                # Causal halo: h2 of the last HW columns of the *previous*
                # time tile, carried in VMEM scratch (stage1 is pointwise in
                # time, so the carried values equal a recompute bit-for-bit).
                halo = carry_ref[bb]                          # (CH, HW)
                if NT > 1:
                    carry_ref[bb] = h2[:, TT - HW:]           # tail for next tile
                h2_buf = jnp.concatenate([halo, h2], axis=1)  # (CH, HW+TT), lane aligned

            # Causal dilated Conv1d(CH -> CH, k=K, dil=DIL): K taps fused into
            # one (CH, K*CH) @ (K*CH, TT) MXU matmul; each shifted slab is
            # materialized exactly once.
            slabs = []
            for j in range(K):
                off = DIL * (K - 1 - j)
                slabs.append(h2 if off == 0
                             else h2_buf[:, HW - off:HW - off + TT])
            stacked = (slabs[0] if K == 1
                       else jnp.concatenate(slabs, axis=0)).astype(mm_dtype)
            h = jnp.dot(w2f, stacked,
                        preferred_element_type=jnp.float32) + c2b

            # LN(CH) -> ReLU -> Conv1x1 back to C channels, then residual.
            h = jnp.maximum(ln(h, g3, b3, CH), 0.0)
            h = jnp.dot(w3, h.astype(mm_dtype),
                        preferred_element_type=jnp.float32) + c3b
            o_ref[bb] = (x + h).astype(o_ref.dtype)

    return kernel


def _default_matmul_dtype():
    # v5e: no bf16 VPU and the MXU has huge slack at these contraction sizes,
    # so skip the bf16 cast traffic.  v6e/v7x: bf16 operands fill the MXU.
    try:
        kind = jax.devices()[0].device_kind.lower()
    except Exception:
        kind = ""
    if "v5 lite" in kind or "v5e" in kind or "v5lite" in kind:
        return jnp.float32
    return jnp.bfloat16


def resblock_pallas(x_bct, params, *, kernel_size, dilation,
                    time_tile=512, batch_block=None, matmul_dtype=None):
    """x_bct: (B, C, T), PyTorch NCW convention.  Returns (B, C, T)."""
    B, C, T = x_bct.shape
    assert C % 2 == 0 and C >= 4, "hidden_dim must be even and >= 4"
    CH = C // 2
    K = kernel_size
    DIL = dilation
    P = int(math.ceil(DIL * (K - 1)))            # causal left pad
    HW = max(128, -(-P // 128) * 128)            # lane-aligned halo width >= P

    # ---- time-tile size TT (the 128-lane axis of every block) ----
    if T % 128 != 0:
        TT = T                                   # single tile (cannot lane-align)
    else:
        req = T if time_tile is None else min(
            T, max(128, (int(time_tile) // 128) * 128))
        TT = 128
        for cand in range(req, 127, -128):       # largest mult. of 128 <= req dividing T
            if T % cand == 0:
                TT = cand
                break
        if TT < HW and TT < T:
            # Large dilation: widen the tile so the carried halo fits inside
            # one previous tile instead of serializing to a single tile.
            bumped = None
            for cand in range(HW, T, 128):
                if T % cand == 0:
                    bumped = cand
                    break
            TT = bumped if bumped is not None else T
    NT = T // TT

    # ---- batch-block size BB (fatter grid steps when B*T is small) ----
    if batch_block is not None:
        BB = int(batch_block)
        assert B % BB == 0
    else:
        BB = 1
        per_b = C * TT * 4
        for cand in range(1, B + 1):
            if B % cand:
                continue
            if cand * per_b > (2 << 20):         # keep in/out blocks modest
                break
            if cand > 1 and B // cand < 2:
                continue                         # keep >= 2 parallel b-blocks (v7x megacore)
            BB = cand
    NB = B // BB

    # ---- matmul operand dtype ----
    if matmul_dtype is None:
        matmul_dtype = _default_matmul_dtype()
    mm_dtype = jnp.dtype(matmul_dtype)
    approx_recip = mm_dtype != jnp.dtype(jnp.float32)

    # ---- weights in matmul form ----
    w1k = params["w1"][:, :, 0].astype(mm_dtype)                         # (CH, C)
    # Fused dilated-conv weight: the K taps concatenated along Cin -> (CH, K*CH).
    w2f = jnp.transpose(params["w2"], (0, 2, 1)).reshape(CH, K * CH).astype(mm_dtype)
    w3k = params["w3"][:, :, 0].astype(mm_dtype)                         # (C, CH)

    # ---- pack the 9 per-channel vectors into one (C, 9) slab ----
    pvec = jnp.zeros((C, _NP), jnp.float32)
    pvec = pvec.at[:, 0].set(params["g1"])
    pvec = pvec.at[:, 1].set(params["b1"])
    pvec = pvec.at[:CH, 2].set(params["c1b"])
    pvec = pvec.at[:CH, 3].set(params["g2"])
    pvec = pvec.at[:CH, 4].set(params["b2"])
    pvec = pvec.at[:CH, 5].set(params["c2b"])
    pvec = pvec.at[:CH, 6].set(params["g3"])
    pvec = pvec.at[:CH, 7].set(params["b3"])
    pvec = pvec.at[:, 8].set(params["c3b"])

    kernel = _make_resblock_kernel(C, CH, BB, TT, HW, K, DIL, P, NT,
                                   mm_dtype, approx_recip)

    # NOTE: the weight / packed-param blocks are grid-invariant; Mosaic does
    # not re-fetch constant-index blocks, and at these widths single-buffering
    # them (pipeline_mode=pl.Buffered(1)) would save only a few KiB of VMEM.
    grid_spec = pltpu.PrefetchScalarGridSpec(
        num_scalar_prefetch=0,
        grid=(NB, NT),
        in_specs=[
            pl.BlockSpec((BB, C, TT), lambda b, t: (b, 0, t)),     # x tile
            pl.BlockSpec((C, _NP), lambda b, t: (0, 0)),           # packed LN/bias params
            pl.BlockSpec((CH, C), lambda b, t: (0, 0)),            # w1
            pl.BlockSpec((CH, K * CH), lambda b, t: (0, 0)),       # fused w2
            pl.BlockSpec((C, CH), lambda b, t: (0, 0)),            # w3
        ],
        out_specs=pl.BlockSpec((BB, C, TT), lambda b, t: (b, 0, t)),
        scratch_shapes=[pltpu.VMEM((BB, CH, HW), jnp.float32)],    # carried h2 tail
    )

    # ---- generation-aware scoped-VMEM budget ----
    f32 = 4
    io_blk = BB * C * TT * f32
    wbytes = (CH * C + CH * K * CH + C * CH) * mm_dtype.itemsize + C * _NP * f32
    interm = ((2 * C + (K + 4) * CH) * TT + CH * (HW + TT)) * f32 * BB
    est = 4 * io_blk + 2 * wbytes + BB * CH * HW * f32 + interm
    try:
        cap = int(pltpu.get_tpu_info().vmem_capacity_bytes)   # 64 MiB/TC v7x, 128 MiB v5e/v6e
    except Exception:
        cap = 64 * 1024 * 1024                                # conservative fallback
    vmem_limit = int(min(max(4 * est, 32 << 20), int(0.75 * cap)))

    return pl.pallas_call(
        kernel,
        out_shape=jax.ShapeDtypeStruct((B, C, T), x_bct.dtype),
        grid_spec=grid_spec,
        compiler_params=pltpu.CompilerParams(
            # Batch blocks are independent ("parallel", feeds both v7x TCs);
            # the time axis is sequential ("arbitrary") due to the carried halo.
            dimension_semantics=("parallel", "arbitrary"),
            vmem_limit_bytes=vmem_limit),
    )(x_bct, pvec, w1k, w2f, w3k)


def resblock_reference(x_bct, params, *, kernel_size, dilation):
    """Pure-JAX reference mirroring the PyTorch module (for validation)."""
    eps = 1e-8

    def ln(z_bct, gamma, beta):
        z = jnp.transpose(z_bct, (0, 2, 1))                     # (B, T, C)
        mu = jnp.mean(z, axis=-1, keepdims=True)
        var = jnp.sum((z - mu) ** 2, axis=-1, keepdims=True) / (z.shape[-1] - 1)
        out = (z - mu) / (jnp.sqrt(var) + eps) * gamma + beta
        return jnp.transpose(out, (0, 2, 1))

    def conv1d(z, w, b, pad, dil):
        y = lax.conv_general_dilated(
            z, w, window_strides=(1,), padding=[(pad, 0)],
            rhs_dilation=(dil,), dimension_numbers=("NCH", "OIH", "NCH"))
        return y + b[None, :, None]

    pad = math.ceil(dilation * (kernel_size - 1))
    h = ln(x_bct, params["g1"], params["b1"])
    h = jnp.maximum(h, 0.0)
    h = conv1d(h, params["w1"], params["c1b"], 0, 1)
    h = ln(h, params["g2"], params["b2"])
    h = jnp.maximum(h, 0.0)
    h = conv1d(h, params["w2"], params["c2b"], pad, dilation)
    h = ln(h, params["g3"], params["b3"])
    h = jnp.maximum(h, 0.0)
    h = conv1d(h, params["w3"], params["c3b"], 0, 1)
    return x_bct + h


def init_params(key, hidden_dim, kernel_size):
    C, CH, K = hidden_dim, hidden_dim // 2, kernel_size
    ks = jax.random.split(key, 12)
    s = 0.1
    return {
        "g1": 1.0 + s * jax.random.normal(ks[0], (C,), jnp.float32),
        "b1": s * jax.random.normal(ks[1], (C,), jnp.float32),
        "g2": 1.0 + s * jax.random.normal(ks[2], (CH,), jnp.float32),
        "b2": s * jax.random.normal(ks[3], (CH,), jnp.float32),
        "g3": 1.0 + s * jax.random.normal(ks[4], (CH,), jnp.float32),
        "b3": s * jax.random.normal(ks[5], (CH,), jnp.float32),
        # Conv weights in PyTorch layout (Cout, Cin, k)
        "w1": s * jax.random.normal(ks[6], (CH, C, 1), jnp.float32),
        "c1b": s * jax.random.normal(ks[7], (CH,), jnp.float32),
        "w2": s * jax.random.normal(ks[8], (CH, CH, K), jnp.float32),
        "c2b": s * jax.random.normal(ks[9], (CH,), jnp.float32),
        "w3": s * jax.random.normal(ks[10], (C, CH, 1), jnp.float32),
        "c3b": s * jax.random.normal(ks[11], (C,), jnp.float32),
    }


if __name__ == "__main__":
    B, HIDDEN, T = 2, 32, 512
    KSIZE, DIL = 3, 2

    key = jax.random.PRNGKey(0)
    kx, kp = jax.random.split(key)
    x = jax.random.normal(kx, (B, HIDDEN, T), jnp.float32)       # (B, C, T) NCW
    params = init_params(kp, HIDDEN, KSIZE)
    ref = resblock_reference(x, params, kernel_size=KSIZE, dilation=DIL)

    def run(xv, pv, **kw):
        fn = jax.jit(functools.partial(resblock_pallas, kernel_size=KSIZE, **kw))
        return jax.block_until_ready(fn(xv, pv))

    # 1) fp32 MXU path, 128-wide time tiles (exercises the carried causal halo).
    out = run(x, params, dilation=DIL, time_tile=128, matmul_dtype=jnp.float32)
    assert out.shape == x.shape and out.dtype == x.dtype
    assert jnp.allclose(out, ref, atol=1e-4, rtol=1e-4), (
        float(jnp.max(jnp.abs(out - ref))))

    # 2) fp32, default fat time tile (T == 512 -> single tile, zero halo).
    out = run(x, params, dilation=DIL, matmul_dtype=jnp.float32)
    assert jnp.allclose(out, ref, atol=1e-4, rtol=1e-4), (
        float(jnp.max(jnp.abs(out - ref))))

    # 3) auto matmul dtype (bf16 on v6e/v7x, fp32 on v5e), looser tolerance.
    out = run(x, params, dilation=DIL, time_tile=128)
    assert jnp.allclose(out, ref, atol=5e-2, rtol=5e-2), (
        float(jnp.max(jnp.abs(out - ref))))

    # 4) batch blocking: B = 4, two batch rows per grid step.
    x4 = jax.random.normal(jax.random.PRNGKey(1), (4, HIDDEN, T), jnp.float32)
    ref4 = resblock_reference(x4, params, kernel_size=KSIZE, dilation=DIL)
    out = run(x4, params, dilation=DIL, time_tile=128, batch_block=2,
              matmul_dtype=jnp.float32)
    assert jnp.allclose(out, ref4, atol=1e-4, rtol=1e-4), (
        float(jnp.max(jnp.abs(out - ref4))))

    # 5) large dilation (P == 128): tiled path must not serialize.
    ref_d = resblock_reference(x, params, kernel_size=KSIZE, dilation=64)
    out = run(x, params, dilation=64, time_tile=128, matmul_dtype=jnp.float32)
    assert jnp.allclose(out, ref_d, atol=1e-4, rtol=1e-4), (
        float(jnp.max(jnp.abs(out - ref_d))))

    # 6) tiny sequence (T < 128 -> single tile, zero halo).
    xs = jax.random.normal(jax.random.PRNGKey(2), (B, HIDDEN, 16), jnp.float32)
    ref_s = resblock_reference(xs, params, kernel_size=KSIZE, dilation=DIL)
    out = run(xs, params, dilation=DIL, matmul_dtype=jnp.float32)
    assert jnp.allclose(out, ref_s, atol=1e-4, rtol=1e-4), (
        float(jnp.max(jnp.abs(out - ref_s))))

    print("KERNEL_OK")
</pallas_src>

<mosaic_0001>
module attributes {stable_mosaic.version = 11 : i64} {
  func.func @kernel(%arg0: i32, %arg1: i32, %arg2: memref<1x32x128xf32, #tpu.memory_space<vmem>>, %arg3: memref<32x9xf32, #tpu.memory_space<vmem>>, %arg4: memref<16x32xf32, #tpu.memory_space<vmem>>, %arg5: memref<16x48xf32, #tpu.memory_space<vmem>>, %arg6: memref<32x16xf32, #tpu.memory_space<vmem>>, %arg7: memref<1x32x128xf32, #tpu.memory_space<vmem>>, %arg8: memref<1x16x128xf32, #tpu.memory_space<vmem>>) attributes {dimension_semantics = [#tpu.dimension_semantics<parallel>, #tpu.dimension_semantics<arbitrary>], iteration_bounds = array<i64: 2, 4>, scalar_prefetch = 0 : i64, scratch_operands = 1 : i64, tpu.core_type = #tpu.core_type<tc>, window_params = [{transform_indices = @transform_0, window_bounds = array<i64: 1, 32, 128>}, {pipeline_mode = #tpu.pipeline_mode<synchronous>, transform_indices = @transform_1, window_bounds = array<i64: 32, 9>}, {pipeline_mode = #tpu.pipeline_mode<synchronous>, transform_indices = @transform_2, window_bounds = array<i64: 16, 32>}, {pipeline_mode = #tpu.pipeline_mode<synchronous>, transform_indices = @transform_3, window_bounds = array<i64: 16, 48>}, {pipeline_mode = #tpu.pipeline_mode<synchronous>, transform_indices = @transform_4, window_bounds = array<i64: 32, 16>}, {transform_indices = @transform_5, window_bounds = array<i64: 1, 32, 128>}]} {
    %c0 = arith.constant 0 : index
    %c0_0 = arith.constant 0 : index
    %0 = vector.load %arg3[%c0, %c0_0] : memref<32x9xf32, #tpu.memory_space<vmem>>, vector<32x9xf32>
    %1 = vector.extract_strided_slice %0 {offsets = [0, 0], sizes = [32, 1], strides = [1, 1]} : vector<32x9xf32> to vector<32x1xf32>
    %2 = vector.extract_strided_slice %0 {offsets = [0, 1], sizes = [32, 1], strides = [1, 1]} : vector<32x9xf32> to vector<32x1xf32>
    %3 = vector.extract_strided_slice %0 {offsets = [0, 2], sizes = [16, 1], strides = [1, 1]} : vector<32x9xf32> to vector<16x1xf32>
    %4 = vector.extract_strided_slice %0 {offsets = [0, 3], sizes = [16, 1], strides = [1, 1]} : vector<32x9xf32> to vector<16x1xf32>
    %5 = vector.extract_strided_slice %0 {offsets = [0, 4], sizes = [16, 1], strides = [1, 1]} : vector<32x9xf32> to vector<16x1xf32>
    %6 = vector.extract_strided_slice %0 {offsets = [0, 5], sizes = [16, 1], strides = [1, 1]} : vector<32x9xf32> to vector<16x1xf32>
    %7 = vector.extract_strided_slice %0 {offsets = [0, 6], sizes = [16, 1], strides = [1, 1]} : vector<32x9xf32> to vector<16x1xf32>
    %8 = vector.extract_strided_slice %0 {offsets = [0, 7], sizes = [16, 1], strides = [1, 1]} : vector<32x9xf32> to vector<16x1xf32>
    %9 = vector.extract_strided_slice %0 {offsets = [0, 8], sizes = [32, 1], strides = [1, 1]} : vector<32x9xf32> to vector<32x1xf32>
    %c0_1 = arith.constant 0 : index
    %c0_2 = arith.constant 0 : index
    %10 = vector.load %arg4[%c0_1, %c0_2] : memref<16x32xf32, #tpu.memory_space<vmem>>, vector<16x32xf32>
    %c0_3 = arith.constant 0 : index
    %c0_4 = arith.constant 0 : index
    %11 = vector.load %arg5[%c0_3, %c0_4] : memref<16x48xf32, #tpu.memory_space<vmem>>, vector<16x48xf32>
    %c0_5 = arith.constant 0 : index
    %c0_6 = arith.constant 0 : index
    %12 = vector.load %arg6[%c0_5, %c0_6] : memref<32x16xf32, #tpu.memory_space<vmem>>, vector<32x16xf32>
    %c0_i32 = arith.constant 0 : i32
    %13 = arith.cmpi eq, %arg1, %c0_i32 : i32
    %14 = arith.extui %13 : i1 to i32
    %c0_i32_7 = arith.constant 0 : i32
    %15 = arith.cmpi ne, %14, %c0_i32_7 : i32
    scf.if %15 {
      %cst_40 = arith.constant 0.000000e+00 : f32
      %109 = vector.broadcast %cst_40 : f32 to vector<1x16x128xf32>
      %c0_41 = arith.constant 0 : index
      %c0_42 = arith.constant 0 : index
      %c0_43 = arith.constant 0 : index
      %110 = vector.load %arg8[%c0_41, %c0_42, %c0_43] : memref<1x16x128xf32, #tpu.memory_space<vmem>>, vector<1x16x128xf32>
      tpu.vector_store %arg8[%c0_41, %c0_42, %c0_43], %109 {strides = array<i32>} : memref<1x16x128xf32, #tpu.memory_space<vmem>>, vector<1x16x128xf32>,
    } else {
    }
    %c0_8 = arith.constant 0 : index
    %c0_9 = arith.constant 0 : index
    %c0_10 = arith.constant 0 : index
    %16 = vector.load %arg2[%c0_8, %c0_9, %c0_10] : memref<1x32x128xf32, #tpu.memory_space<vmem>>, vector<1x32x128xf32>
    %17 = vector.shape_cast %16 : vector<1x32x128xf32> to vector<32x128xf32>
    %cst = arith.constant dense<0.000000e+00> : vector<128xf32>
    %18 = vector.multi_reduction <add>, %17, %cst [0] : vector<32x128xf32> to vector<128xf32>
    %19 = vector.shape_cast %18 : vector<128xf32> to vector<1x128xf32>
    %cst_11 = arith.constant 3.200000e+01 : f32
    %20 = vector.broadcast %cst_11 : f32 to vector<1x128xf32>
    %21 = arith.divf %19, %20 : vector<1x128xf32>
    %22 = vector.broadcast %21 : vector<1x128xf32> to vector<32x128xf32>
    %23 = arith.subf %17, %22 : vector<32x128xf32>
    %24 = arith.mulf %23, %23 : vector<32x128xf32>
    %cst_12 = arith.constant dense<0.000000e+00> : vector<128xf32>
    %25 = vector.multi_reduction <add>, %24, %cst_12 [0] : vector<32x128xf32> to vector<128xf32>
    %26 = vector.shape_cast %25 : vector<128xf32> to vector<1x128xf32>
    %cst_13 = arith.constant 3.100000e+01 : f32
    %27 = vector.broadcast %cst_13 : f32 to vector<1x128xf32>
    %28 = arith.divf %26, %27 : vector<1x128xf32>
    %29 = math.sqrt %28 : vector<1x128xf32>
    %cst_14 = arith.constant 9.99999993E-9 : f32
    %30 = vector.broadcast %cst_14 : f32 to vector<1x128xf32>
    %31 = arith.addf %29, %30 : vector<1x128xf32>
    %32 = tpu.reciprocal %31 : vector<1x128xf32> -> vector<1x128xf32>
    %33 = vector.broadcast %32 : vector<1x128xf32> to vector<32x128xf32>
    %34 = arith.mulf %23, %33 : vector<32x128xf32>
    %35 = vector.broadcast %1 : vector<32x1xf32> to vector<32x128xf32>
    %36 = arith.mulf %34, %35 : vector<32x128xf32>
    %37 = vector.broadcast %2 : vector<32x1xf32> to vector<32x128xf32>
    %38 = arith.addf %36, %37 : vector<32x128xf32>
    %cst_15 = arith.constant 0.000000e+00 : f32
    %39 = vector.broadcast %cst_15 : f32 to vector<32x128xf32>
    %40 = arith.maximumf %38, %39 : vector<32x128xf32>
    %cst_16 = arith.constant dense<0.000000e+00> : vector<16x128xf32>
    %41 = tpu.matmul %10, %40, %cst_16 {dimension_numbers = #tpu.dot_dimension_numbers<[1], [0], [0], [1], [0, 0, 1, 1], [], []>} : vector<16x32xf32>, vector<32x128xf32>, vector<16x128xf32> -> vector<16x128xf32>
    %42 = vector.broadcast %3 : vector<16x1xf32> to vector<16x128xf32>
    %43 = arith.addf %41, %42 : vector<16x128xf32>
    %cst_17 = arith.constant dense<0.000000e+00> : vector<128xf32>
    %44 = vector.multi_reduction <add>, %43, %cst_17 [0] : vector<16x128xf32> to vector<128xf32>
    %45 = vector.shape_cast %44 : vector<128xf32> to vector<1x128xf32>
    %cst_18 = arith.constant 1.600000e+01 : f32
    %46 = vector.broadcast %cst_18 : f32 to vector<1x128xf32>
    %47 = arith.divf %45, %46 : vector<1x128xf32>
    %48 = vector.broadcast %47 : vector<1x128xf32> to vector<16x128xf32>
    %49 = arith.subf %43, %48 : vector<16x128xf32>
    %50 = arith.mulf %49, %49 : vector<16x128xf32>
    %cst_19 = arith.constant dense<0.000000e+00> : vector<128xf32>
    %51 = vector.multi_reduction <add>, %50, %cst_19 [0] : vector<16x128xf32> to vector<128xf32>
    %52 = vector.shape_cast %51 : vector<128xf32> to vector<1x128xf32>
    %cst_20 = arith.constant 1.500000e+01 : f32
    %53 = vector.broadcast %cst_20 : f32 to vector<1x128xf32>
    %54 = arith.divf %52, %53 : vector<1x128xf32>
    %55 = math.sqrt %54 : vector<1x128xf32>
    %cst_21 = arith.constant 9.99999993E-9 : f32
    %56 = vector.broadcast %cst_21 : f32 to vector<1x128xf32>
    %57 = arith.addf %55, %56 : vector<1x128xf32>
    %58 = tpu.reciprocal %57 : vector<1x128xf32> -> vector<1x128xf32>
    %59 = vector.broadcast %58 : vector<1x128xf32> to vector<16x128xf32>
    %60 = arith.mulf %49, %59 : vector<16x128xf32>
    %61 = vector.broadcast %4 : vector<16x1xf32> to vector<16x128xf32>
    %62 = arith.mulf %60, %61 : vector<16x128xf32>
    %63 = vector.broadcast %5 : vector<16x1xf32> to vector<16x128xf32>
    %64 = arith.addf %62, %63 : vector<16x128xf32>
    %cst_22 = arith.constant 0.000000e+00 : f32
    %65 = vector.broadcast %cst_22 : f32 to vector<16x128xf32>
    %66 = arith.maximumf %64, %65 : vector<16x128xf32>
    %c0_23 = arith.constant 0 : index
    %c0_24 = arith.constant 0 : index
    %c0_25 = arith.constant 0 : index
    %67 = vector.load %arg8[%c0_23, %c0_24, %c0_25] : memref<1x16x128xf32, #tpu.memory_space<vmem>>, vector<1x16x128xf32>
    %68 = vector.shape_cast %67 : vector<1x16x128xf32> to vector<16x128xf32>
    %c0_26 = arith.constant 0 : index
    %c0_27 = arith.constant 0 : index
    %c0_28 = arith.constant 0 : index
    %69 = vector.load %arg8[%c0_26, %c0_27, %c0_28] : memref<1x16x128xf32, #tpu.memory_space<vmem>>, vector<1x16x128xf32>
    %70 = vector.shape_cast %69 : vector<1x16x128xf32> to vector<16x128xf32>
    %71 = vector.shape_cast %66 : vector<16x128xf32> to vector<1x16x128xf32>
    tpu.vector_store %arg8[%c0_26, %c0_27, %c0_28], %71 {strides = array<i32>} : memref<1x16x128xf32, #tpu.memory_space<vmem>>, vector<1x16x128xf32>,
    %72 = tpu.concatenate %68, %66 in 1 : vector<16x128xf32>, vector<16x128xf32> -> vector<16x256xf32>
    %73 = vector.extract_strided_slice %72 {offsets = [0, 124], sizes = [16, 128], strides = [1, 1]} : vector<16x256xf32> to vector<16x128xf32>
    %74 = vector.extract_strided_slice %72 {offsets = [0, 126], sizes = [16, 128], strides = [1, 1]} : vector<16x256xf32> to vector<16x128xf32>
    %75 = tpu.concatenate %73, %74, %66 in 0 : vector<16x128xf32>, vector<16x128xf32>, vector<16x128xf32> -> vector<48x128xf32>
    %cst_29 = arith.constant dense<0.000000e+00> : vector<16x128xf32>
    %76 = tpu.matmul %11, %75, %cst_29 {dimension_numbers = #tpu.dot_dimension_numbers<[1], [0], [0], [1], [0, 0, 1, 1], [], []>} : vector<16x48xf32>, vector<48x128xf32>, vector<16x128xf32> -> vector<16x128xf32>
    %77 = vector.broadcast %6 : vector<16x1xf32> to vector<16x128xf32>
    %78 = arith.addf %76, %77 : vector<16x128xf32>
    %cst_30 = arith.constant dense<0.000000e+00> : vector<128xf32>
    %79 = vector.multi_reduction <add>, %78, %cst_30 [0] : vector<16x128xf32> to vector<128xf32>
    %80 = vector.shape_cast %79 : vector<128xf32> to vector<1x128xf32>
    %cst_31 = arith.constant 1.600000e+01 : f32
    %81 = vector.broadcast %cst_31 : f32 to vector<1x128xf32>
    %82 = arith.divf %80, %81 : vector<1x128xf32>
    %83 = vector.broadcast %82 : vector<1x128xf32> to vector<16x128xf32>
    %84 = arith.subf %78, %83 : vector<16x128xf32>
    %85 = arith.mulf %84, %84 : vector<16x128xf32>
    %cst_32 = arith.constant dense<0.000000e+00> : vector<128xf32>
    %86 = vector.multi_reduction <add>, %85, %cst_32 [0] : vector<16x128xf32> to vector<128xf32>
    %87 = vector.shape_cast %86 : vector<128xf32> to vector<1x128xf32>
    %cst_33 = arith.constant 1.500000e+01 : f32
    %88 = vector.broadcast %cst_33 : f32 to vector<1x128xf32>
    %89 = arith.divf %87, %88 : vector<1x128xf32>
    %90 = math.sqrt %89 : vector<1x128xf32>
    %cst_34 = arith.constant 9.99999993E-9 : f32
    %91 = vector.broadcast %cst_34 : f32 to vector<1x128xf32>
    %92 = arith.addf %90, %91 : vector<1x128xf32>
    %93 = tpu.reciprocal %92 : vector<1x128xf32> -> vector<1x128xf32>
    %94 = vector.broadcast %93 : vector<1x128xf32> to vector<16x128xf32>
    %95 = arith.mulf %84, %94 : vector<16x128xf32>
    %96 = vector.broadcast %7 : vector<16x1xf32> to vector<16x128xf32>
    %97 = arith.mulf %95, %96 : vector<16x128xf32>
    %98 = vector.broadcast %8 : vector<16x1xf32> to vector<16x128xf32>
    %99 = arith.addf %97, %98 : vector<16x128xf32>
    %cst_35 = arith.constant 0.000000e+00 : f32
    %100 = vector.broadcast %cst_35 : f32 to vector<16x128xf32>
    %101 = arith.maximumf %99, %100 : vector<16x128xf32>
    %cst_36 = arith.constant dense<0.000000e+00> : vector<32x128xf32>
    %102 = tpu.matmul %12, %101, %cst_36 {dimension_numbers = #tpu.dot_dimension_numbers<[1], [0], [0], [1], [0, 0, 1, 1], [], []>} : vector<32x16xf32>, vector<16x128xf32>, vector<32x128xf32> -> vector<32x128xf32>
    %103 = vector.broadcast %9 : vector<32x1xf32> to vector<32x128xf32>
    %104 = arith.addf %102, %103 : vector<32x128xf32>
    %105 = arith.addf %17, %104 : vector<32x128xf32>
    %c0_37 = arith.constant 0 : index
    %c0_38 = arith.constant 0 : index
    %c0_39 = arith.constant 0 : index
    %106 = vector.load %arg7[%c0_37, %c0_38, %c0_39] : memref<1x32x128xf32, #tpu.memory_space<vmem>>, vector<1x32x128xf32>
    %107 = vector.shape_cast %106 : vector<1x32x128xf32> to vector<32x128xf32>
    %108 = vector.shape_cast %105 : vector<32x128xf32> to vector<1x32x128xf32>
    tpu.vector_store %arg7[%c0_37, %c0_38, %c0_39], %108 {strides = array<i32>} : memref<1x32x128xf32, #tpu.memory_space<vmem>>, vector<1x32x128xf32>,
    return
  }
  func.func @transform_0(%arg0: i32, %arg1: i32) -> (i32, i32, i32) {
    %c0_i32 = arith.constant 0 : i32
    %c0_i32_0 = arith.constant 0 : i32
    return %arg0, %c0_i32, %arg1 : i32, i32, i32
  }
  func.func @transform_1(%arg0: i32, %arg1: i32) -> (i32, i32) {
    %c0_i32 = arith.constant 0 : i32
    %c0_i32_0 = arith.constant 0 : i32
    %c0_i32_1 = arith.constant 0 : i32
    return %c0_i32, %c0_i32_0 : i32, i32
  }
  func.func @transform_2(%arg0: i32, %arg1: i32) -> (i32, i32) {
    %c0_i32 = arith.constant 0 : i32
    %c0_i32_0 = arith.constant 0 : i32
    %c0_i32_1 = arith.constant 0 : i32
    return %c0_i32, %c0_i32_0 : i32, i32
  }
  func.func @transform_3(%arg0: i32, %arg1: i32) -> (i32, i32) {
    %c0_i32 = arith.constant 0 : i32
    %c0_i32_0 = arith.constant 0 : i32
    %c0_i32_1 = arith.constant 0 : i32
    return %c0_i32, %c0_i32_0 : i32, i32
  }
  func.func @transform_4(%arg0: i32, %arg1: i32) -> (i32, i32) {
    %c0_i32 = arith.constant 0 : i32
    %c0_i32_0 = arith.constant 0 : i32
    %c0_i32_1 = arith.constant 0 : i32
    return %c0_i32, %c0_i32_0 : i32, i32
  }
  func.func @transform_5(%arg0: i32, %arg1: i32) -> (i32, i32, i32) {
    %c0_i32 = arith.constant 0 : i32
    %c0_i32_0 = arith.constant 0 : i32
    return %arg0, %c0_i32, %arg1 : i32, i32, i32
  }
}

</mosaic_0001>

<llo_original>
// kernel: resblock_pallas.1
$region0: #{resblock_pallas.1}
  #allocation0 [shape = 'u32[]', space=smem, size = 0x4, offset = 0x4, fixed_abs, tag = 'smem constant byte address 0x4 - core index']
  #allocation1 [shape = 'u32[144,128]{1,0:T(1,128)}', space=vmem, size = 0x12000, scoped, tag = 'internal scratch']
  #allocation2 [shape = 'f32[1,16,128]{2,1,0:T(8,128)}', space=vmem, size = 0x2000, scoped, tag = 'scratch operand']
  %s0 = inlined_call_operand.vmem [shape: f32[2,32,512], index: 0, kind: input, shape index: {}]
  %s1 = inlined_call_operand.vmem [shape: f32[32,9], index: 1, kind: input, shape index: {}]
  %s2 = inlined_call_operand.vmem [shape: f32[16,32], index: 2, kind: input, shape index: {}]
  %s3 = inlined_call_operand.vmem [shape: f32[16,48], index: 3, kind: input, shape index: {}]
  %s4 = inlined_call_operand.vmem [shape: f32[32,16], index: 4, kind: input, shape index: {}]
  %s5 = inlined_call_operand.hbm [shape: f32[2,32,512], index: 5, kind: output, shape index: {}]
  %s6 = sld [smem:[#allocation0]]
  $region95: #{resblock_pallas.1} parent=0
    _
  %s8 = ssub.s32 1, %s6
  %s9 = scalar_select 0, %s8, %s6
  $region1: #{resblock_pallas.1} parent=0
    #allocation3 [shape = 'u8[32768]{0}', space=vmem, size = 0x8000, scoped, tag = 'input window, operand 0']
    #allocation4 [shape = 'u8[32768]{0}', space=vmem, size = 0x8000, scoped, tag = 'output window, operand 0']
    #allocation5 [shape = 's32[2]{0}', space=sflag, size = 0x8, scoped, tag = 'scoped memory for resblock_pallas.1']
    %10 = vsyncpa [#allocation5], 0
    %s11 = scalar_lea.sflag [#allocation5], 1
    %12 = vsyncpa %s11, 0
    loop: start=0, step=1, limit=10
    $region2: #{resblock_pallas.1} parent=1 // loop_pre_header
      _
    $region3: #{resblock_pallas.1} parent=1 // loop_header
      %s14 = sphi 0, %s18
      %p15 = scmp.ge.s32.totalorder %s14, 10
      %s21 = sphi 0, %s33
      %s22 = sphi 0, %s29
      %s23 = sphi 0, %s21
      %s24 = sphi 0, %s22
      %s25 = sphi 0, %s23
      %s26 = sphi 0, %s24
      %s38 = sphi 0, %s40
      %s41 = sphi 0, %s38
      %s42 = sphi 0, %s41
      %s58 = sphi 0, %s42
      %s62 = sphi 0, %s62
      %s64 = sphi 0, %s62
      %s65 = sphi 0, %s64
      %s79 = sphi 0, %s65
      %s83 = sphi 0, %s83
      %s85 = sphi 0, %s83
      %s86 = sphi 0, %s85
      %s100 = sphi 0, %s86
      %s104 = sphi 0, %s104
      %s106 = sphi 0, %s104
      %s107 = sphi 0, %s106
      %s121 = sphi 0, %s107
      %s125 = sphi 0, %s125
      %s127 = sphi 0, %s125
      %s128 = sphi 0, %s127
      %s142 = sphi 0, %s128
      %s150 = sphi 0, %s152
      %s153 = sphi 0, %s150
      %s154 = sphi 0, %s153
      %s170 = sphi 0, %s154
    $region4: #{resblock_pallas.1} parent=1 // loop_header_branch
      %17 = sbr.rel (%p15) target = $region8
    $region5: #{resblock_pallas.1} parent=1 // loop_body
      %s19 = ssub.s32 %s14, 1
      %s20 = ssub.s32 %s14, 2
      %s27 = sadd.s32 1, %s22
      %p28 = scmp.ge.s32.totalorder %s27, 4
      %s29 = scalar_select %p28, 0, %s27
      %s30 = sadd.s32 1, %s21
      %s31 = scalar_select %p28, %s30, %s21
      %p32 = scmp.ge.s32.totalorder %s31, 2
      %s33 = scalar_select %p32, 0, %s31
      %s34 = ssub.s32 %s21, %s33
      %s35 = ssub.s32 %s22, %s29
      %s36 = sor.u32 %s34, %s35
      %p37 = scmp.eq.s32.totalorder %s36, 0
      %s39 = sadd.s32 %s38, 1
      %s40 = scalar_select %p37, %s38, %s39
      %p43 = pneg %p37
      %p44 = scmp.eq.s32.totalorder %s14, 7
      %p45 = por %p43, %p44
      %p46 = scmp.ne.s32.totalorder %s38, %s41
      %p47 = scmp.eq.s32.totalorder %s14, 0
      %p48 = por %p46, %p47
      %p49 = scmp.ne.s32.totalorder %s38, %s41
      %p50 = scmp.eq.s32.totalorder %s19, 7
      %p51 = por %p49, %p50
      %p52 = scmp.ne.s32.totalorder %s41, %s42
      %p53 = scmp.eq.s32.totalorder %s19, 0
      %p54 = por %p52, %p53
      %p55 = scmp.ne.s32.totalorder %s41, %s42
      %p56 = scmp.eq.s32.totalorder %s20, 7
      %p57 = por %p55, %p56
      %p59 = scmp.ne.s32.totalorder %s42, %s58
      %p60 = scmp.eq.s32.totalorder %s20, 0
      %p61 = por %p59, %p60
      %s63 = sadd.s32 %s62, 1
      %p66 = scmp.eq.s32.totalorder %s14, 7
      %p67 = scmp.ne.s32.totalorder %s62, %s64
      %p68 = scmp.eq.s32.totalorder %s14, 0
      %p69 = por %p67, %p68
      %p70 = scmp.ne.s32.totalorder %s62, %s64
      %p71 = scmp.eq.s32.totalorder %s19, 7
      %p72 = por %p70, %p71
      %p73 = scmp.ne.s32.totalorder %s64, %s65
      %p74 = scmp.eq.s32.totalorder %s19, 0
      %p75 = por %p73, %p74
      %p76 = scmp.ne.s32.totalorder %s64, %s65
      %p77 = scmp.eq.s32.totalorder %s20, 7
      %p78 = por %p76, %p77
      %p80 = scmp.ne.s32.totalorder %s65, %s79
      %p81 = scmp.eq.s32.totalorder %s20, 0
      %p82 = por %p80, %p81
      %s84 = sadd.s32 %s83, 1
      %p87 = scmp.eq.s32.totalorder %s14, 7
      %p88 = scmp.ne.s32.totalorder %s83, %s85
      %p89 = scmp.eq.s32.totalorder %s14, 0
      %p90 = por %p88, %p89
      %p91 = scmp.ne.s32.totalorder %s83, %s85
      %p92 = scmp.eq.s32.totalorder %s19, 7
      %p93 = por %p91, %p92
      %p94 = scmp.ne.s32.totalorder %s85, %s86
      %p95 = scmp.eq.s32.totalorder %s19, 0
      %p96 = por %p94, %p95
      %p97 = scmp.ne.s32.totalorder %s85, %s86
      %p98 = scmp.eq.s32.totalorder %s20, 7
      %p99 = por %p97, %p98
      %p101 = scmp.ne.s32.totalorder %s86, %s100
      %p102 = scmp.eq.s32.totalorder %s20, 0
      %p103 = por %p101, %p102
      %s105 = sadd.s32 %s104, 1
      %p108 = scmp.eq.s32.totalorder %s14, 7
      %p109 = scmp.ne.s32.totalorder %s104, %s106
      %p110 = scmp.eq.s32.totalorder %s14, 0
      %p111 = por %p109, %p110
      %p112 = scmp.ne.s32.totalorder %s104, %s106
      %p113 = scmp.eq.s32.totalorder %s19, 7
      %p114 = por %p112, %p113
      %p115 = scmp.ne.s32.totalorder %s106, %s107
      %p116 = scmp.eq.s32.totalorder %s19, 0
      %p117 = por %p115, %p116
      %p118 = scmp.ne.s32.totalorder %s106, %s107
      %p119 = scmp.eq.s32.totalorder %s20, 7
      %p120 = por %p118, %p119
      %p122 = scmp.ne.s32.totalorder %s107, %s121
      %p123 = scmp.eq.s32.totalorder %s20, 0
      %p124 = por %p122, %p123
      %s126 = sadd.s32 %s125, 1
      %p129 = scmp.eq.s32.totalorder %s14, 7
      %p130 = scmp.ne.s32.totalorder %s125, %s127
      %p131 = scmp.eq.s32.totalorder %s14, 0
      %p132 = por %p130, %p131
      %p133 = scmp.ne.s32.totalorder %s125, %s127
      %p134 = scmp.eq.s32.totalorder %s19, 7
      %p135 = por %p133, %p134
      %p136 = scmp.ne.s32.totalorder %s127, %s128
      %p137 = scmp.eq.s32.totalorder %s19, 0
      %p138 = por %p136, %p137
      %p139 = scmp.ne.s32.totalorder %s127, %s128
      %p140 = scmp.eq.s32.totalorder %s20, 7
      %p141 = por %p139, %p140
      %p143 = scmp.ne.s32.totalorder %s128, %s142
      %p144 = scmp.eq.s32.totalorder %s20, 0
      %p145 = por %p143, %p144
      %s146 = ssub.s32 %s21, %s33
      %s147 = ssub.s32 %s22, %s29
      %s148 = sor.u32 %s146, %s147
      %p149 = scmp.eq.s32.totalorder %s148, 0
      %s151 = sadd.s32 %s150, 1
      %s152 = scalar_select %p149, %s150, %s151
      %p155 = pneg %p149
      %p156 = scmp.eq.s32.totalorder %s14, 7
      %p157 = por %p155, %p156
      %p158 = scmp.ne.s32.totalorder %s150, %s153
      %p159 = scmp.eq.s32.totalorder %s14, 0
      %p160 = por %p158, %p159
      %p161 = scmp.ne.s32.totalorder %s150, %s153
      %p162 = scmp.eq.s32.totalorder %s19, 7
      %p163 = por %p161, %p162
      %p164 = scmp.ne.s32.totalorder %s153, %s154
      %p165 = scmp.eq.s32.totalorder %s19, 0
      %p166 = por %p164, %p165
      %p167 = scmp.ne.s32.totalorder %s153, %s154
      %p168 = scmp.eq.s32.totalorder %s20, 7
      %p169 = por %p167, %p168
      %p171 = scmp.ne.s32.totalorder %s154, %s170
      %p172 = scmp.eq.s32.totalorder %s20, 0
      %p173 = por %p171, %p172
      %p174 = scmp.le.s32.totalorder 1, %s14
      %p175 = scmp.lt.s32.totalorder %s14, 9
      %p176 = pnand %p174, %p175
      %p177 = pneg %p176
      // Predicated region
      $region9: #{resblock_pallas.1} parent=5 // pred_check
        _
      $region10: #{resblock_pallas.1} parent=5 // pred_check_branch
        %179 = sbr.rel (%p176) target = $region12
      $region11: #{resblock_pallas.1} parent=5 // pred_region
        %s180 = ssub.s32 %s14, 1
        // Predicated region
        $region13: #{resblock_pallas.1} parent=11 // pred_check
          %p181 = pneg %p75
        $region14: #{resblock_pallas.1} parent=11 // pred_check_branch
          %183 = sbr.rel (%p181) target = $region16
        $region15: #{resblock_pallas.1} parent=11 // pred_region
          _
        $region16: #{resblock_pallas.1} parent=11 // pred_fallthru
          _
        // Predicated region
        $region17: #{resblock_pallas.1} parent=11 // pred_check
          %p184 = pneg %p96
        $region18: #{resblock_pallas.1} parent=11 // pred_check_branch
          %186 = sbr.rel (%p184) target = $region20
        $region19: #{resblock_pallas.1} parent=11 // pred_region
          _
        $region20: #{resblock_pallas.1} parent=11 // pred_fallthru
          _
        // Predicated region
        $region21: #{resblock_pallas.1} parent=11 // pred_check
          %p187 = pneg %p117
        $region22: #{resblock_pallas.1} parent=11 // pred_check_branch
          %189 = sbr.rel (%p187) target = $region24
        $region23: #{resblock_pallas.1} parent=11 // pred_region
          _
        $region24: #{resblock_pallas.1} parent=11 // pred_fallthru
          _
        // Predicated region
        $region25: #{resblock_pallas.1} parent=11 // pred_check
          %p190 = pneg %p138
        $region26: #{resblock_pallas.1} parent=11 // pred_check_branch
          %192 = sbr.rel (%p190) target = $region28
        $region27: #{resblock_pallas.1} parent=11 // pred_region
          _
        $region28: #{resblock_pallas.1} parent=11 // pred_fallthru
          _
      $region12: #{resblock_pallas.1} parent=5 // pred_fallthru
        _
      %p193 = scmp.lt.s32.totalorder %s14, 8
      // Predicated region
      $region29: #{resblock_pallas.1} parent=5 // pred_check
        %p194 = pneg %p193
      $region30: #{resblock_pallas.1} parent=5 // pred_check_branch
        %196 = sbr.rel (%p194) target = $region32
      $region31: #{resblock_pallas.1} parent=5 // pred_region
        // Predicated region
        $region33: #{resblock_pallas.1} parent=31 // pred_check
          %p197 = pneg %p48
        $region34: #{resblock_pallas.1} parent=31 // pred_check_branch
          %199 = sbr.rel (%p197) target = $region36
        $region35: #{resblock_pallas.1} parent=31 // pred_region
          %s200 = sand.u32 %s38, 1
          %s201 = sand.u32 %s38, 1
          %s202 = smul.addr %s201, 32
          %s203 = scalar_lea.vmem [#allocation3], %s202
          %s204 = smul.addr %s21, 16
          %s205 = sadd.s32 %s22, %s204
          %s206 = smul.addr %s205, 8
          %s207 = scalar_lea.vmem %s0, %s206
          // Predicated region
          $region37: #{resblock_pallas.1} parent=35 // pred_check
            _
          $region38: #{resblock_pallas.1} parent=35 // pred_check_branch
            %209 = sbr.rel (0) target = $region40
          $region39: #{resblock_pallas.1} parent=35 // pred_region
            // Predicated region
            $region41: #{resblock_pallas.1} parent=39 // pred_check
              _
            $region42: #{resblock_pallas.1} parent=39 // pred_check_branch
              %211 = sbr.rel (0) target = $region44
            $region43: #{resblock_pallas.1} parent=39 // pred_region
              // Predicated region
              $region56: #{resblock_pallas.1} parent=43 // pred_check
                _
              $region57: #{resblock_pallas.1} parent=43 // pred_check_branch
                %232 = sbr.rel (0) target = $region59
              $region58: #{resblock_pallas.1} parent=43 // pred_region
                loop: start=0, step=1, limit=1
                $region60: #{resblock_pallas.1} parent=58 // loop_pre_header
                  _
                $region61: #{resblock_pallas.1} parent=58 // loop_header
                  %s234 = sphi 0, %s238
                  %p235 = scmp.ge.s32.totalorder %s234, 1
                  %s239 = sphi %s207, %s207
                  %s240 = sphi %s203, %s203
                $region62: #{resblock_pallas.1} parent=58 // loop_header_branch
                  %237 = sbr.rel (%p235) target = $region66
                $region63: #{resblock_pallas.1} parent=58 // loop_body
                  %v241 = vld [vmem:[%s239] sm:$0xff]
                  %242 = vst [vmem:[%s240] sm:$0xff] %v241
                  %v243 = vld [vmem:[%s239 + $0x20] sm:$0xff]
                  %244 = vst [vmem:[%s240 + $0x8] sm:$0xff] %v243
                  %v245 = vld [vmem:[%s239 + $0x40] sm:$0xff]
                  %246 = vst [vmem:[%s240 + $0x10] sm:$0xff] %v245
                  %v247 = vld [vmem:[%s239 + $0x60] sm:$0xff]
                  %248 = vst [vmem:[%s240 + $0x18] sm:$0xff] %v247
                $region64: #{resblock_pallas.1} parent=58 // loop_footer
                  %s238 = sadd.s32 1, %s234
                $region65: #{resblock_pallas.1} parent=58 // loop_footer_branch
                  %233 = sbr.rel target = $region61
                $region66: #{resblock_pallas.1} parent=58 // loop_exit
                  _
              $region59: #{resblock_pallas.1} parent=43 // pred_fallthru
                _
              // Predicated region
              $region67: #{resblock_pallas.1} parent=43 // pred_check
                _
              $region68: #{resblock_pallas.1} parent=43 // pred_check_branch
                %250 = sbr.rel target = $region70
              $region69: #{resblock_pallas.1} parent=43 // pred_region
                _
              $region70: #{resblock_pallas.1} parent=43 // pred_fallthru
                _
            $region44: #{resblock_pallas.1} parent=39 // pred_fallthru
              _
            // Predicated region
            $region45: #{resblock_pallas.1} parent=39 // pred_check
              _
            $region46: #{resblock_pallas.1} parent=39 // pred_check_branch
              %213 = sbr.rel target = $region48
            $region47: #{resblock_pallas.1} parent=39 // pred_region
              loop: start=0, step=1, limit=1
              $region49: #{resblock_pallas.1} parent=47 // loop_pre_header
                _
              $region50: #{resblock_pallas.1} parent=47 // loop_header
                %s216 = sphi 0, %s220
                %p217 = scmp.ge.s32.totalorder %s216, 1
                %s221 = sphi %s207, %s207
                %s222 = sphi %s203, %s203
              $region51: #{resblock_pallas.1} parent=47 // loop_header_branch
                %219 = sbr.rel (%p217) target = $region55
              $region52: #{resblock_pallas.1} parent=47 // loop_body
                %v223 = vld [vmem:[%s221] sm:$0xff]
                %224 = vst [vmem:[%s222] sm:$0xff] %v223
                %v225 = vld [vmem:[%s221 + $0x20] sm:$0xff]
                %226 = vst [vmem:[%s222 + $0x8] sm:$0xff] %v225
                %v227 = vld [vmem:[%s221 + $0x40] sm:$0xff]
                %228 = vst [vmem:[%s222 + $0x10] sm:$0xff] %v227
                %v229 = vld [vmem:[%s221 + $0x60] sm:$0xff]
                %230 = vst [vmem:[%s222 + $0x18] sm:$0xff] %v229
              $region53: #{resblock_pallas.1} parent=47 // loop_footer
                %s220 = sadd.s32 1, %s216
              $region54: #{resblock_pallas.1} parent=47 // loop_footer_branch
                %215 = sbr.rel target = $region50
              $region55: #{resblock_pallas.1} parent=47 // loop_exit
                _
            $region48: #{resblock_pallas.1} parent=39 // pred_fallthru
              _
          $region40: #{resblock_pallas.1} parent=35 // pred_fallthru
            _
          %251 = vnop
        $region36: #{resblock_pallas.1} parent=31 // pred_fallthru
          _
      $region32: #{resblock_pallas.1} parent=5 // pred_fallthru
        _
      %p252 = scmp.le.s32.totalorder 1, %s14
      %p253 = scmp.lt.s32.totalorder %s14, 9
      %p254 = pnand %p252, %p253
      %p255 = pneg %p254
      // Predicated region
      $region71: #{resblock_pallas.1} parent=5 // pred_check
        _
      $region72: #{resblock_pallas.1} parent=5 // pred_check_branch
        %257 = sbr.rel (%p254) target = $region74
      $region73: #{resblock_pallas.1} parent=5 // pred_region
        %s258 = ssub.s32 %s14, 1
        %s259 = sand.u32 %s41, 1
        %s260 = sand.u32 %s41, 1
        %s261 = smul.addr %s260, 32
        %s262 = scalar_lea.vmem [#allocation3], %s261
        // Predicated region
        $region75: #{resblock_pallas.1} parent=73 // pred_check
          %p263 = pneg %p54
        $region76: #{resblock_pallas.1} parent=73 // pred_check_branch
          %265 = sbr.rel (%p263) target = $region78
        $region77: #{resblock_pallas.1} parent=73 // pred_region
          _
        $region78: #{resblock_pallas.1} parent=73 // pred_fallthru
          _
        %s266 = sand.u32 %s41, 1
        %s267 = sand.u32 %s41, 1
        %s268 = smul.addr %s267, 32
        %s269 = scalar_lea.vmem [#allocation3], %s268
        %p270 = pneg %p54
        %p271 = pneg %p51
        %p272 = pneg %p75
        %p273 = pneg %p72
        %p274 = pneg %p96
        %p275 = pneg %p93
        %p276 = pneg %p117
        %p277 = pneg %p114
        %p278 = pneg %p138
        %p279 = pneg %p135
        %p280 = pneg %p166
        %p281 = pneg %p163
        %s282 = sand.u32 %s153, 1
        %s283 = scalar_lea.sflag [#allocation5], %s282
        %s284 = sand.u32 %s153, 1
        %s285 = smul.addr %s284, 32
        %s286 = scalar_lea.vmem [#allocation4], %s285
        %v287 = vld [vmem:[%s1] sm:$0xff]
        %v288 = vld [vmem:[%s1 + $0x8] sm:$0xff]
        %v289 = vld [vmem:[%s1 + $0x10] sm:$0xff]
        %v290 = vld [vmem:[%s1 + $0x18] sm:$0xff]
        %v291 = vld [vmem:[%s2] sm:$0xff]
        %v292 = vld [vmem:[%s2 + $0x8] sm:$0xff]
        %v293 = vld [vmem:[%s3] sm:$0xff]
        %v294 = vld [vmem:[%s3 + $0x8] sm:$0xff]
        %v295 = vld [vmem:[%s4] sm:$0xff]
        %v296 = vld [vmem:[%s4 + $0x8] sm:$0xff]
        %v297 = vld [vmem:[%s4 + $0x10] sm:$0xff]
        %v298 = vld [vmem:[%s4 + $0x18] sm:$0xff]
        %p299 = scmp.eq.s32.totalorder %s24, 0
        // Predicated region
        $region79: #{resblock_pallas.1} parent=73 // pred_check
          %p300 = pneg %p299
        $region80: #{resblock_pallas.1} parent=73 // pred_check_branch
          %302 = sbr.rel (%p300) target = $region82
        $region81: #{resblock_pallas.1} parent=73 // pred_region
          %303 = vst [vmem:[#allocation2] sm:$0xff] 0.0
          %304 = vst [vmem:[#allocation2 + $0x8] sm:$0xff] 0.0
        $region82: #{resblock_pallas.1} parent=73 // pred_fallthru
          _
        %v305 = vld [vmem:[%s262] sm:$0xff]
        %v306 = vld [vmem:[%s262 + $0x8] sm:$0xff]
        %v307 = vld [vmem:[%s262 + $0x10] sm:$0xff]
        %v308 = vld [vmem:[%s262 + $0x18] sm:$0xff]
        %v309 = vadd.f32 %v305, %v306
        %v310 = vadd.f32 %v309, %v307
        %v311 = vadd.f32 %v310, %v308
        %v312 = vrot.slane %v311, 4
        %v313 = vadd.f32 %v311, %v312
        %v314 = vrot.slane %v313, 2
        %v315 = vadd.f32 %v313, %v314
        %v316 = vrot.slane %v315, 1
        %v317 = vadd.f32 %v315, %v316
        %v318 = vrcp.pop 32.0
        %v319 = vmul.f32 %v317, %v318
        %v320 = vsub.f32 %v305, %v319
        %v321 = vsub.f32 %v306, %v319
        %v322 = vsub.f32 %v307, %v319
        %v323 = vsub.f32 %v308, %v319
        %v324 = vmul.f32 %v320, %v320
        %v325 = vmul.f32 %v321, %v321
        %v326 = vmul.f32 %v322, %v322
        %v327 = vmul.f32 %v323, %v323
        %v328 = vadd.f32 %v324, %v325
        %v329 = vadd.f32 %v328, %v326
        %v330 = vadd.f32 %v329, %v327
        %v331 = vrot.slane %v330, 4
        %v332 = vadd.f32 %v330, %v331
        %v333 = vrot.slane %v332, 2
        %v334 = vadd.f32 %v332, %v333
        %v335 = vrot.slane %v334, 1
        %v336 = vadd.f32 %v334, %v335
        %v337 = vrcp.pop 31.0
        %v338 = vmul.f32 %v336, %v337
        %v339 = vrsqrt.pop %v338
        %v340 = vmul.f32 %v338, %v339
        %vm341 = vcmp.eq.f32.partialorder %v338, inf
        %v342 = vsel %vm341, %v338, %v340
        %vm343 = vcmp.eq.f32.partialorder %v338, 0.0
        %v344 = vand.u32 %v338, 2147483648
        %v345 = vsel %vm343, %v344, %v342
        %v346 = vadd.f32 %v345, 1e-08
        %v347 = vrcp.pop %v346
        %v348 = vmul.f32 %v320, %v347
        %v349 = vmul.f32 %v321, %v347
        %v350 = vmul.f32 %v322, %v347
        %v351 = vmul.f32 %v323, %v347
        %353 = vset.pattern.permute.xlu0 0
        %354 = vperm.xlu0 %353, %v287
        %v355 = vpop.permute.xlu0 %354
        %358 = vset.pattern.permute.xlu0 0
        %359 = vperm.xlu0 %358, %v288
        %v360 = vpop.permute.xlu0 %359
        %363 = vset.pattern.permute.xlu0 0
        %364 = vperm.xlu0 %363, %v289
        %v365 = vpop.permute.xlu0 %364
        %368 = vset.pattern.permute.xlu0 0
        %369 = vperm.xlu0 %368, %v290
        %v370 = vpop.permute.xlu0 %369
        %v372 = vmul.f32 %v348, %v355
        %v373 = vmul.f32 %v349, %v360
        %v374 = vmul.f32 %v350, %v365
        %v375 = vmul.f32 %v351, %v370
        %376 = vset.pattern.permute.xlu0 1
        %377 = vperm.xlu0 %376, %v287
        %v378 = vpop.permute.xlu0 %377
        %380 = vset.pattern.permute.xlu0 1
        %381 = vperm.xlu0 %380, %v288
        %v382 = vpop.permute.xlu0 %381
        %384 = vset.pattern.permute.xlu0 1
        %385 = vperm.xlu0 %384, %v289
        %v386 = vpop.permute.xlu0 %385
        %388 = vset.pattern.permute.xlu0 1
        %389 = vperm.xlu0 %388, %v290
        %v390 = vpop.permute.xlu0 %389
        %v392 = vadd.f32 %v372, %v378
        %v393 = vadd.f32 %v373, %v382
        %v394 = vadd.f32 %v374, %v386
        %v395 = vadd.f32 %v375, %v390
        %v396 = vmax.f32 %v392, 0.0
        %v397 = vmax.f32 %v393, 0.0
        %v398 = vmax.f32 %v394, 0.0
        %v399 = vmax.f32 %v395, 0.0
        %400 = vset.pattern.permute.xlu0 2
        %401 = vperm.xlu0 %400, %v287
        %v402 = vpop.permute.xlu0 %401
        %404 = vset.pattern.permute.xlu0 2
        %405 = vperm.xlu0 %404, %v288
        %v406 = vpop.permute.xlu0 %405
        %vm408 = vcmask 261120
        %v410 = vsel %vm408, %v291, 0
        %v413 = vsel %vm408, %v292, 0
        %415 = vmatprep.subr.mxu0 0.0
        %416 = vmatpush1.msra.mxu0 %v396
        %417 = vmatprep.subr.mxu0 0.0
        %418 = vmatpush1.msra.mxu0 %v397
        %419 = vmatprep.subr.mxu0 0.0
        %420 = vmatpush1.msra.mxu0 %v398
        %421 = vmatprep.subr.mxu0 0.0
        %422 = vmatpush1.msra.mxu0 %v399
        %423 = vmatprep.subr.mxu0 0.0
        %424 = vmatpush1.msra.mxu0 0.0
        %425 = vmatprep.subr.mxu0 0.0
        %426 = vmatpush1.msra.mxu0 0.0
        %427 = vmatprep.subr.mxu0 0.0
        %428 = vmatpush1.msra.mxu0 0.0
        %429 = vmatprep.subr.mxu0 0.0
        %430 = vmatpush1.msra.mxu0 0.0
        %431 = vmatprep.subr.mxu0 0.0
        %432 = vmatpush1.msra.mxu0 0.0
        %433 = vmatprep.subr.mxu0 0.0
        %434 = vmatpush1.msra.mxu0 0.0
        %435 = vmatprep.subr.mxu0 0.0
        %436 = vmatpush1.msra.mxu0 0.0
        %437 = vmatprep.subr.mxu0 0.0
        %438 = vmatpush1.msra.mxu0 0.0
        %439 = vmatprep.subr.mxu0 0.0
        %440 = vmatpush1.msra.mxu0 0.0
        %441 = vmatprep.subr.mxu0 0.0
        %442 = vmatpush1.msra.mxu0 0.0
        %443 = vmatprep.subr.mxu0 0.0
        %444 = vmatpush1.msra.mxu0 0.0
        %445 = vmatprep.subr.mxu0 0.0
        %446 = vmatpush1.msra.mxu0 0.0
        %447 = vmatprep.subr.mxu0 0.0
        %448 = vmatpush1.msra.mxu0 0.0
        %449 = vmatprep.subr.mxu0 0.0
        %450 = vmatpush1.msra.mxu0 0.0
        %451 = vmatprep.subr.mxu0 0.0
        %452 = vmatpush1.msra.mxu0 0.0
        %453 = vmatprep.subr.mxu0 0.0
        %454 = vmatpush1.msra.mxu0 0.0
        %455 = vmatprep.subr.mxu0 0.0
        %456 = vmatpush1.msra.mxu0 0.0
        %457 = vmatprep.subr.mxu0 0.0
        %458 = vmatpush1.msra.mxu0 0.0
        %459 = vmatprep.subr.mxu0 0.0
        %460 = vmatpush1.msra.mxu0 0.0
        %461 = vmatprep.subr.mxu0 0.0
        %462 = vmatpush1.msra.mxu0 0.0
        %463 = vmatprep.subr.mxu0 0.0
        %464 = vmatpush1.msra.mxu0 0.0
        %465 = vmatprep.subr.mxu0 0.0
        %466 = vmatpush1.msra.mxu0 0.0
        %467 = vmatprep.subr.mxu0 0.0
        %468 = vmatpush1.msra.mxu0 0.0
        %469 = vmatprep.subr.mxu0 0.0
        %470 = vmatpush1.msra.mxu0 0.0
        %471 = vmatprep.subr.mxu0 0.0
        %472 = vmatpush1.msra.mxu0 0.0
        %473 = vmatprep.subr.mxu0 0.0
        %474 = vmatpush1.msra.mxu0 0.0
        %475 = vmatprep.subr.mxu0 0.0
        %476 = vmatpush1.msra.mxu0 0.0
        %477 = vmatprep.subr.mxu0 0.0
        %478 = vmatpush1.msra.mxu0 0.0
        %479 = vmatprep.mubr.f32.mxu0 0.0
        %480 = vmatmul.mubr.f32.gmra.mrb[0].mxu0 %v410
        %v481 = vpop.f32.mrb[0].mxu0
        %v482 = vadd.f32 %v402, %v481
        %v483 = vpop.f32.mrb[0].mxu0
        %484 = vmatprep.mubr.f32.mxu0 0.0
        %485 = vmatmul.mubr.f32.gmra.mrb[0].mxu0 %v413
        %v486 = vpop.f32.mrb[0].mxu0
        %v487 = vadd.f32 %v406, %v486
        %v488 = vpop.f32.mrb[0].mxu0
        %489 = vdwg.mxu0
        %v490 = vadd.f32 %v482, %v487
        %v491 = vrot.slane %v490, 4
        %v492 = vadd.f32 %v490, %v491
        %v493 = vrot.slane %v492, 2
        %v494 = vadd.f32 %v492, %v493
        %v495 = vrot.slane %v494, 1
        %v496 = vadd.f32 %v494, %v495
        %v497 = vrcp.pop 16.0
        %v498 = vmul.f32 %v496, %v497
        %v499 = vsub.f32 %v482, %v498
        %v500 = vsub.f32 %v487, %v498
        %v501 = vmul.f32 %v499, %v499
        %v502 = vmul.f32 %v500, %v500
        %v503 = vadd.f32 %v501, %v502
        %v504 = vrot.slane %v503, 4
        %v505 = vadd.f32 %v503, %v504
        %v506 = vrot.slane %v505, 2
        %v507 = vadd.f32 %v505, %v506
        %v508 = vrot.slane %v507, 1
        %v509 = vadd.f32 %v507, %v508
        %v510 = vrcp.pop 15.0
        %v511 = vmul.f32 %v509, %v510
        %v512 = vrsqrt.pop %v511
        %v513 = vmul.f32 %v511, %v512
        %vm514 = vcmp.eq.f32.partialorder %v511, inf
        %v515 = vsel %vm514, %v511, %v513
        %vm516 = vcmp.eq.f32.partialorder %v511, 0.0
        %v517 = vand.u32 %v511, 2147483648
        %v518 = vsel %vm516, %v517, %v515
        %v519 = vadd.f32 %v518, 1e-08
        %v520 = vrcp.pop %v519
        %v521 = vmul.f32 %v499, %v520
        %v522 = vmul.f32 %v500, %v520
        %523 = vset.pattern.permute.xlu0 3
        %524 = vperm.xlu0 %523, %v287
        %v525 = vpop.permute.xlu0 %524
        %527 = vset.pattern.permute.xlu0 3
        %528 = vperm.xlu0 %527, %v288
        %v529 = vpop.permute.xlu0 %528
        %v531 = vmul.f32 %v521, %v525
        %v532 = vmul.f32 %v522, %v529
        %533 = vset.pattern.permute.xlu0 4
        %534 = vperm.xlu0 %533, %v287
        %v535 = vpop.permute.xlu0 %534
        %537 = vset.pattern.permute.xlu0 4
        %538 = vperm.xlu0 %537, %v288
        %v539 = vpop.permute.xlu0 %538
        %v541 = vadd.f32 %v531, %v535
        %v542 = vadd.f32 %v532, %v539
        %v543 = vmax.f32 %v541, 0.0
        %v544 = vmax.f32 %v542, 0.0
        %v545 = vld [vmem:[#allocation2] sm:$0xff]
        %v546 = vld [vmem:[#allocation2 + $0x8] sm:$0xff]
        %547 = vst [vmem:[#allocation2] sm:$0xff] %v543
        %548 = vst [vmem:[#allocation2 + $0x8] sm:$0xff] %v544
        %553 = vrot.lane.b32.xlu0 %v545, 126
        %v554 = vpop.permute.xlu0 %553
        %555 = vrot.lane.b32.xlu0 %v543, 126
        %v556 = vpop.permute.xlu0 %555
        %557 = vrot.lane.b32.xlu0 %v546, 126
        %v558 = vpop.permute.xlu0 %557
        %559 = vrot.lane.b32.xlu0 %v544, 126
        %v560 = vpop.permute.xlu0 %559
        %vm561 = vcmask 1031168
        %v562 = vsel %vm561, %v554, %v556
        %v563 = vsel %vm561, %v558, %v560
        %564 = vrot.lane.b32.xlu0 %v543, 124
        %v565 = vpop.permute.xlu0 %564
        %566 = vrot.lane.b32.xlu0 %v544, 124
        %v567 = vpop.permute.xlu0 %566
        %568 = vset.pattern.permute.xlu0 5
        %569 = vperm.xlu0 %568, %v287
        %v570 = vpop.permute.xlu0 %569
        %572 = vset.pattern.permute.xlu0 5
        %573 = vperm.xlu0 %572, %v288
        %v574 = vpop.permute.xlu0 %573
        %576 = vrot.lane.b32.xlu0 %v545, 4
        %v577 = vpop.permute.xlu0 %576
        %578 = vrot.lane.b32.xlu0 %v543, 4
        %v579 = vpop.permute.xlu0 %578
        %580 = vrot.lane.b32.xlu0 %v546, 4
        %v581 = vpop.permute.xlu0 %580
        %582 = vrot.lane.b32.xlu0 %v544, 4
        %v583 = vpop.permute.xlu0 %582
        %584 = vrot.lane.b32.xlu0 %v562, 4
        %v585 = vpop.permute.xlu0 %584
        %586 = vrot.lane.b32.xlu0 %v556, 4
        %v587 = vpop.permute.xlu0 %586
        %588 = vrot.lane.b32.xlu0 %v563, 4
        %v589 = vpop.permute.xlu0 %588
        %590 = vrot.lane.b32.xlu0 %v560, 4
        %v591 = vpop.permute.xlu0 %590
        %592 = vrot.lane.b32.xlu0 %v565, 4
        %v593 = vpop.permute.xlu0 %592
        %594 = vrot.lane.b32.xlu0 %v567, 4
        %v595 = vpop.permute.xlu0 %594
        %vm596 = vcmask 31744
        %v597 = vsel %vm596, %v577, %v579
        %v598 = vsel %vm596, %v581, %v583
        %v599 = vsel %vm596, %v585, %v587
        %v600 = vsel %vm596, %v589, %v591
        %vm607 = vcmask 392192
        %v609 = vsel %vm607, %v293, 0
        %v612 = vsel %vm607, %v294, 0
        %614 = vmatprep.subr.mxu0 0.0
        %615 = vmatpush1.msra.mxu0 %v597
        %616 = vmatprep.subr.mxu0 0.0
        %617 = vmatpush1.msra.mxu0 %v598
        %618 = vmatprep.subr.mxu0 0.0
        %619 = vmatpush1.msra.mxu0 %v599
        %620 = vmatprep.subr.mxu0 0.0
        %621 = vmatpush1.msra.mxu0 %v600
        %622 = vmatprep.subr.mxu0 0.0
        %623 = vmatpush1.msra.mxu0 %v593
        %624 = vmatprep.subr.mxu0 0.0
        %625 = vmatpush1.msra.mxu0 %v595
        %626 = vmatprep.subr.mxu0 0.0
        %627 = vmatpush1.msra.mxu0 0.0
        %628 = vmatprep.subr.mxu0 0.0
        %629 = vmatpush1.msra.mxu0 0.0
        %630 = vmatprep.subr.mxu0 0.0
        %631 = vmatpush1.msra.mxu0 0.0
        %632 = vmatprep.subr.mxu0 0.0
        %633 = vmatpush1.msra.mxu0 0.0
        %634 = vmatprep.subr.mxu0 0.0
        %635 = vmatpush1.msra.mxu0 0.0
        %636 = vmatprep.subr.mxu0 0.0
        %637 = vmatpush1.msra.mxu0 0.0
        %638 = vmatprep.subr.mxu0 0.0
        %639 = vmatpush1.msra.mxu0 0.0
        %640 = vmatprep.subr.mxu0 0.0
        %641 = vmatpush1.msra.mxu0 0.0
        %642 = vmatprep.subr.mxu0 0.0
        %643 = vmatpush1.msra.mxu0 0.0
        %644 = vmatprep.subr.mxu0 0.0
        %645 = vmatpush1.msra.mxu0 0.0
        %646 = vmatprep.subr.mxu0 0.0
        %647 = vmatpush1.msra.mxu0 0.0
        %648 = vmatprep.subr.mxu0 0.0
        %649 = vmatpush1.msra.mxu0 0.0
        %650 = vmatprep.subr.mxu0 0.0
        %651 = vmatpush1.msra.mxu0 0.0
        %652 = vmatprep.subr.mxu0 0.0
        %653 = vmatpush1.msra.mxu0 0.0
        %654 = vmatprep.subr.mxu0 0.0
        %655 = vmatpush1.msra.mxu0 0.0
        %656 = vmatprep.subr.mxu0 0.0
        %657 = vmatpush1.msra.mxu0 0.0
        %658 = vmatprep.subr.mxu0 0.0
        %659 = vmatpush1.msra.mxu0 0.0
        %660 = vmatprep.subr.mxu0 0.0
        %661 = vmatpush1.msra.mxu0 0.0
        %662 = vmatprep.subr.mxu0 0.0
        %663 = vmatpush1.msra.mxu0 0.0
        %664 = vmatprep.subr.mxu0 0.0
        %665 = vmatpush1.msra.mxu0 0.0
        %666 = vmatprep.subr.mxu0 0.0
        %667 = vmatpush1.msra.mxu0 0.0
        %668 = vmatprep.subr.mxu0 0.0
        %669 = vmatpush1.msra.mxu0 0.0
        %670 = vmatprep.subr.mxu0 0.0
        %671 = vmatpush1.msra.mxu0 0.0
        %672 = vmatprep.subr.mxu0 0.0
        %673 = vmatpush1.msra.mxu0 0.0
        %674 = vmatprep.subr.mxu0 0.0
        %675 = vmatpush1.msra.mxu0 0.0
        %676 = vmatprep.subr.mxu0 0.0
        %677 = vmatpush1.msra.mxu0 0.0
        %678 = vmatprep.mubr.f32.mxu0 0.0
        %679 = vmatmul.mubr.f32.gmra.mrb[0].mxu0 %v609
        %v680 = vpop.f32.mrb[0].mxu0
        %v681 = vadd.f32 %v570, %v680
        %v682 = vpop.f32.mrb[0].mxu0
        %683 = vmatprep.mubr.f32.mxu0 0.0
        %684 = vmatmul.mubr.f32.gmra.mrb[0].mxu0 %v612
        %v685 = vpop.f32.mrb[0].mxu0
        %v686 = vadd.f32 %v574, %v685
        %v687 = vpop.f32.mrb[0].mxu0
        %688 = vdwg.mxu0
        %v689 = vadd.f32 %v681, %v686
        %v690 = vrot.slane %v689, 4
        %v691 = vadd.f32 %v689, %v690
        %v692 = vrot.slane %v691, 2
        %v693 = vadd.f32 %v691, %v692
        %v694 = vrot.slane %v693, 1
        %v695 = vadd.f32 %v693, %v694
        %v696 = vmul.f32 %v695, %v497
        %v697 = vsub.f32 %v681, %v696
        %v698 = vsub.f32 %v686, %v696
        %v699 = vmul.f32 %v697, %v697
        %v700 = vmul.f32 %v698, %v698
        %v701 = vadd.f32 %v699, %v700
        %v702 = vrot.slane %v701, 4
        %v703 = vadd.f32 %v701, %v702
        %v704 = vrot.slane %v703, 2
        %v705 = vadd.f32 %v703, %v704
        %v706 = vrot.slane %v705, 1
        %v707 = vadd.f32 %v705, %v706
        %v708 = vmul.f32 %v707, %v510
        %v709 = vrsqrt.pop %v708
        %v710 = vmul.f32 %v708, %v709
        %vm711 = vcmp.eq.f32.partialorder %v708, inf
        %v712 = vsel %vm711, %v708, %v710
        %vm713 = vcmp.eq.f32.partialorder %v708, 0.0
        %v714 = vand.u32 %v708, 2147483648
        %v715 = vsel %vm713, %v714, %v712
        %v716 = vadd.f32 %v715, 1e-08
        %v717 = vrcp.pop %v716
        %v718 = vmul.f32 %v697, %v717
        %v719 = vmul.f32 %v698, %v717
        %720 = vset.pattern.permute.xlu0 6
        %721 = vperm.xlu0 %720, %v287
        %v722 = vpop.permute.xlu0 %721
        %724 = vset.pattern.permute.xlu0 6
        %725 = vperm.xlu0 %724, %v288
        %v726 = vpop.permute.xlu0 %725
        %v728 = vmul.f32 %v718, %v722
        %v729 = vmul.f32 %v719, %v726
        %730 = vset.pattern.permute.xlu0 7
        %731 = vperm.xlu0 %730, %v287
        %v732 = vpop.permute.xlu0 %731
        %734 = vset.pattern.permute.xlu0 7
        %735 = vperm.xlu0 %734, %v288
        %v736 = vpop.permute.xlu0 %735
        %v738 = vadd.f32 %v728, %v732
        %v739 = vadd.f32 %v729, %v736
        %v740 = vmax.f32 %v738, 0.0
        %v741 = vmax.f32 %v739, 0.0
        %742 = vset.pattern.permute.xlu0 8
        %743 = vperm.xlu0 %742, %v287
        %v744 = vpop.permute.xlu0 %743
        %746 = vset.pattern.permute.xlu0 8
        %747 = vperm.xlu0 %746, %v288
        %v748 = vpop.permute.xlu0 %747
        %750 = vset.pattern.permute.xlu0 8
        %751 = vperm.xlu0 %750, %v289
        %v752 = vpop.permute.xlu0 %751
        %754 = vset.pattern.permute.xlu0 8
        %755 = vperm.xlu0 %754, %v290
        %v756 = vpop.permute.xlu0 %755
        %vm758 = vcmask 130048
        %v760 = vsel %vm758, %v295, 0
        %v763 = vsel %vm758, %v296, 0
        %v766 = vsel %vm758, %v297, 0
        %v769 = vsel %vm758, %v298, 0
        %771 = vmatprep.subr.mxu0 0.0
        %772 = vmatpush1.msra.mxu0 %v740
        %773 = vmatprep.subr.mxu0 0.0
        %774 = vmatpush1.msra.mxu0 %v741
        %775 = vmatprep.subr.mxu0 0.0
        %776 = vmatpush1.msra.mxu0 0.0
        %777 = vmatprep.subr.mxu0 0.0
        %778 = vmatpush1.msra.mxu0 0.0
        %779 = vmatprep.subr.mxu0 0.0
        %780 = vmatpush1.msra.mxu0 0.0
        %781 = vmatprep.subr.mxu0 0.0
        %782 = vmatpush1.msra.mxu0 0.0
        %783 = vmatprep.subr.mxu0 0.0
        %784 = vmatpush1.msra.mxu0 0.0
        %785 = vmatprep.subr.mxu0 0.0
        %786 = vmatpush1.msra.mxu0 0.0
        %787 = vmatprep.subr.mxu0 0.0
        %788 = vmatpush1.msra.mxu0 0.0
        %789 = vmatprep.subr.mxu0 0.0
        %790 = vmatpush1.msra.mxu0 0.0
        %791 = vmatprep.subr.mxu0 0.0
        %792 = vmatpush1.msra.mxu0 0.0
        %793 = vmatprep.subr.mxu0 0.0
        %794 = vmatpush1.msra.mxu0 0.0
        %795 = vmatprep.subr.mxu0 0.0
        %796 = vmatpush1.msra.mxu0 0.0
        %797 = vmatprep.subr.mxu0 0.0
        %798 = vmatpush1.msra.mxu0 0.0
        %799 = vmatprep.subr.mxu0 0.0
        %800 = vmatpush1.msra.mxu0 0.0
        %801 = vmatprep.subr.mxu0 0.0
        %802 = vmatpush1.msra.mxu0 0.0
        %803 = vmatprep.subr.mxu0 0.0
        %804 = vmatpush1.msra.mxu0 0.0
        %805 = vmatprep.subr.mxu0 0.0
        %806 = vmatpush1.msra.mxu0 0.0
        %807 = vmatprep.subr.mxu0 0.0
        %808 = vmatpush1.msra.mxu0 0.0
        %809 = vmatprep.subr.mxu0 0.0
        %810 = vmatpush1.msra.mxu0 0.0
        %811 = vmatprep.subr.mxu0 0.0
        %812 = vmatpush1.msra.mxu0 0.0
        %813 = vmatprep.subr.mxu0 0.0
        %814 = vmatpush1.msra.mxu0 0.0
        %815 = vmatprep.subr.mxu0 0.0
        %816 = vmatpush1.msra.mxu0 0.0
        %817 = vmatprep.subr.mxu0 0.0
        %818 = vmatpush1.msra.mxu0 0.0
        %819 = vmatprep.subr.mxu0 0.0
        %820 = vmatpush1.msra.mxu0 0.0
        %821 = vmatprep.subr.mxu0 0.0
        %822 = vmatpush1.msra.mxu0 0.0
        %823 = vmatprep.subr.mxu0 0.0
        %824 = vmatpush1.msra.mxu0 0.0
        %825 = vmatprep.subr.mxu0 0.0
        %826 = vmatpush1.msra.mxu0 0.0
        %827 = vmatprep.subr.mxu0 0.0
        %828 = vmatpush1.msra.mxu0 0.0
        %829 = vmatprep.subr.mxu0 0.0
        %830 = vmatpush1.msra.mxu0 0.0
        %831 = vmatprep.subr.mxu0 0.0
        %832 = vmatpush1.msra.mxu0 0.0
        %833 = vmatprep.subr.mxu0 0.0
        %834 = vmatpush1.msra.mxu0 0.0
        %835 = vmatprep.mubr.f32.mxu0 0.0
        %836 = vmatmul.mubr.f32.gmra.mrb[0].mxu0 %v760
        %v837 = vpop.f32.mrb[0].mxu0
        %v838 = vadd.f32 %v744, %v837
        %v839 = vpop.f32.mrb[0].mxu0
        %840 = vmatprep.mubr.f32.mxu0 0.0
        %841 = vmatmul.mubr.f32.gmra.mrb[0].mxu0 %v763
        %v842 = vpop.f32.mrb[0].mxu0
        %v843 = vadd.f32 %v748, %v842
        %v844 = vpop.f32.mrb[0].mxu0
        %845 = vmatprep.mubr.f32.mxu0 0.0
        %846 = vmatmul.mubr.f32.gmra.mrb[0].mxu0 %v766
        %v847 = vpop.f32.mrb[0].mxu0
        %v848 = vadd.f32 %v752, %v847
        %v849 = vpop.f32.mrb[0].mxu0
        %850 = vmatprep.mubr.f32.mxu0 0.0
        %851 = vmatmul.mubr.f32.gmra.mrb[0].mxu0 %v769
        %v852 = vpop.f32.mrb[0].mxu0
        %v853 = vadd.f32 %v756, %v852
        %v854 = vpop.f32.mrb[0].mxu0
        %855 = vdwg.mxu0
        %v856 = vadd.f32 %v305, %v838
        %v857 = vadd.f32 %v306, %v843
        %v858 = vadd.f32 %v307, %v848
        %v859 = vadd.f32 %v308, %v853
        %860 = vst [vmem:[%s286] sm:$0xff] %v856
        %861 = vst [vmem:[%s286 + $0x8] sm:$0xff] %v857
        %862 = vst [vmem:[%s286 + $0x10] sm:$0xff] %v858
        %863 = vst [vmem:[%s286 + $0x18] sm:$0xff] %v859
        %s864 = sand.u32 %s153, 1
        %s865 = scalar_lea.sflag [#allocation5], %s864
        %s866 = sand.u32 %s153, 1
        %s867 = smul.addr %s866, 32
        %s868 = scalar_lea.vmem [#allocation4], %s867
        // Predicated region
        $region83: #{resblock_pallas.1} parent=73 // pred_check
          %p869 = pneg %p163
        $region84: #{resblock_pallas.1} parent=73 // pred_check_branch
          %871 = sbr.rel (%p869) target = $region86
        $region85: #{resblock_pallas.1} parent=73 // pred_region
          %s873 = ssub.s32 512, 512
          %874 = vsyncadd %s865, %s873
          %s875 = smul.addr %s23, 16
          %s876 = sadd.s32 %s24, %s875
          %s877 = smul.addr %s876, 128
          %s878 = scalar_lea.hbm %s5, %s877
          %s879 = sshll.u32 %s868, 4
          %s880 = int_to_ptr.vmem [resolvable:$true] %s879
          %885 = dma.vmem_to_hbm [thread:$0]  %s880, 512, %s878, %s865, 128, 512, 8
        $region86: #{resblock_pallas.1} parent=73 // pred_fallthru
          _
      $region74: #{resblock_pallas.1} parent=5 // pred_fallthru
        _
      %p886 = scmp.le.s32.totalorder 2, %s14
      // Predicated region
      $region87: #{resblock_pallas.1} parent=5 // pred_check
        %p887 = pneg %p886
      $region88: #{resblock_pallas.1} parent=5 // pred_check_branch
        %889 = sbr.rel (%p887) target = $region90
      $region89: #{resblock_pallas.1} parent=5 // pred_region
        %s890 = ssub.s32 %s14, 2
        // Predicated region
        $region91: #{resblock_pallas.1} parent=89 // pred_check
          %p891 = pneg %p169
        $region92: #{resblock_pallas.1} parent=89 // pred_check_branch
          %893 = sbr.rel (%p891) target = $region94
        $region93: #{resblock_pallas.1} parent=89 // pred_region
          %s894 = sand.u32 %s154, 1
          %s895 = scalar_lea.sflag [#allocation5], %s894
          %s896 = sand.u32 %s154, 1
          %s897 = smul.addr %s896, 32
          %s898 = scalar_lea.vmem [#allocation4], %s897
          %899 = dma.done %s895, 512
        $region94: #{resblock_pallas.1} parent=89 // pred_fallthru
          _
      $region90: #{resblock_pallas.1} parent=5 // pred_fallthru
        _
    $region6: #{resblock_pallas.1} parent=1 // loop_footer
      %s18 = sadd.s32 1, %s14
    $region7: #{resblock_pallas.1} parent=1 // loop_footer_branch
      %13 = sbr.rel target = $region3
    $region8: #{resblock_pallas.1} parent=1 // loop_exit
      _
    %900 = vsyncpa [#allocation5], 1
    %s901 = scalar_lea.sflag [#allocation5], 1
    %902 = vsyncpa %s901, 1

</llo_original>
